<compile_context>
chip_gen: v5e
topology: v5e:2x2
jax: 0.10.0
libtpu: 0.0.40
codegen_flags: <defaults>
</compile_context>

<pallas_src>
import jax
import jax.numpy as jnp
from jax import lax
from jax.experimental import pallas as pl
from jax.experimental.pallas import tpu as pltpu

_LANES = 128
_MAX_BLOCK_ROWS = 8192            # 8192 * 128 * 4B = 4 MiB per f32 input block
_MIN_PALLAS_ELEMS = 256 * 1024    # below this, plain jnp is already near roofline
_HARD_MIN_ELEMS = 1024            # kernel path needs >= 8 lane-aligned rows


def _num_tensorcores() -> int:
    """2 TensorCores per JAX device on megacore chips (v4/v5p) and v7x; else 1."""
    try:
        dev = jax.devices()[0]
        if dev.platform != "tpu":
            return 1
        kind = str(getattr(dev, "device_kind", "")).lower()
    except Exception:
        return 1
    if any(tag in kind for tag in ("v4", "v5p", "v7", "7x")):
        return 2
    return 1


def _binary_sum_f32(x):
    ax = jnp.abs(x)
    return jnp.sum(jnp.minimum(ax, jnp.abs(1.0 - ax)))


def _mse_sum_f32(x, t):
    d = jax.nn.sigmoid(x) - t
    return jnp.sum(d * d)


def _loss_jnp(x, t=None):
    """Plain-jnp fast path (small inputs) and ragged-tail helper."""
    n = x.size
    xf = x.astype(jnp.float32)
    loss = _binary_sum_f32(xf) / n
    if t is not None:
        loss = loss + _mse_sum_f32(xf, t.astype(jnp.float32)) / n
    return loss


def _make_kernel(*, block_rows, steps_per_core, total_blocks, full_blocks,
                 valid_rows_last, has_partial_last, overflow_possible,
                 has_target, two_d_grid):
    groups = block_rows // 8  # block_rows is always a multiple of 8 on the kernel path

    def kernel(*refs):
        if has_target:
            x_ref, t_ref, bin_out, mse_out, bin_acc, mse_acc = refs
        else:
            x_ref, bin_out, bin_acc = refs
            t_ref = mse_out = mse_acc = None

        if two_d_grid:
            c = pl.program_id(0)
            i = pl.program_id(1)
            last_i = pl.num_programs(1) - 1
            blk = c * steps_per_core + i
        else:
            i = pl.program_id(0)
            last_i = pl.num_programs(0) - 1
            blk = i

        @pl.when(i == 0)
        def _():
            bin_acc[...] = jnp.zeros_like(bin_acc)
            if has_target:
                mse_acc[...] = jnp.zeros_like(mse_acc)

        def accumulate(row_limit):
            x = x_ref[...].astype(jnp.float32)
            ax = jnp.abs(x)
            binary = jnp.minimum(ax, jnp.abs(1.0 - ax))
            if has_target:
                t = t_ref[...].astype(jnp.float32)
                # sigmoid(x) = 0.5*tanh(0.5*x) + 0.5  -> transcendental on the EUP slot
                sig = 0.5 * jnp.tanh(0.5 * x) + 0.5
                d = sig - t
                sq = d * d
            if row_limit is not None:
                rows_iota = lax.broadcasted_iota(jnp.int32, (block_rows, _LANES), 0)
                valid = rows_iota < row_limit
                # select (not multiply): OOB garbage/NaN never propagates
                binary = jnp.where(valid, binary, 0.0)
                if has_target:
                    sq = jnp.where(valid, sq, 0.0)
            # pure-VPU accumulation into an (8,128) tile; XLU reduce deferred to the end
            bin_acc[...] += jnp.sum(binary.reshape(groups, 8, _LANES), axis=0)
            if has_target:
                mse_acc[...] += jnp.sum(sq.reshape(groups, 8, _LANES), axis=0)

        if (not has_partial_last) and (not overflow_possible):
            # Hot path: every block is full and in range -> no mask, no guard.
            accumulate(None)
        else:
            if full_blocks > 0:
                @pl.when(blk < full_blocks)
                def _():
                    accumulate(None)

            if has_partial_last:
                @pl.when(blk == total_blocks - 1)
                def _():
                    accumulate(valid_rows_last)
            # blk >= total_blocks (clamped duplicate step): skip entirely.

        @pl.when(i == last_i)
        def _():
            bin_out[...] = jnp.sum(bin_acc[...]).reshape(1, 1, 1)
            if has_target:
                mse_out[...] = jnp.sum(mse_acc[...]).reshape(1, 1, 1)

    return kernel


def ldpc_consistency_loss(soft_codeword: jax.Array,
                          target_codeword=None,
                          *,
                          min_pallas_elems: int = _MIN_PALLAS_ELEMS) -> jax.Array:
    """Pallas implementation of LDPCConsistencyLoss.forward."""
    n = soft_codeword.size
    has_target = target_codeword is not None
    if has_target:
        assert target_codeword.shape == soft_codeword.shape

    # Small-input fast path: pallas_call fixed overhead dominates; XLA fusion wins.
    if n < max(min_pallas_elems, _HARD_MIN_ELEMS):
        return _loss_jnp(soft_codeword, target_codeword)

    flat_x = soft_codeword.reshape(-1)
    flat_t = target_codeword.reshape(-1) if has_target else None

    rows = n // _LANES
    n_aligned = rows * _LANES

    # Ragged (<128-element) tail handled in plain jnp; only the lane-aligned prefix
    # goes through the kernel. Aligned shapes (the common LDPC case) are copy-free.
    tail_bin = jnp.float32(0.0)
    tail_mse = jnp.float32(0.0)
    if n_aligned != n:
        tx = flat_x[n_aligned:].astype(jnp.float32)
        tail_bin = _binary_sum_f32(tx)
        if has_target:
            tail_mse = _mse_sum_f32(tx, flat_t[n_aligned:].astype(jnp.float32))
        flat_x = flat_x[:n_aligned]
        if has_target:
            flat_t = flat_t[:n_aligned]

    x2d = flat_x.reshape(rows, _LANES)
    inputs = [x2d]
    if has_target:
        inputs.append(flat_t.reshape(rows, _LANES))

    # rows >= 8 guaranteed by the fast-path floor; keep block_rows a multiple of 8.
    block_rows = min(_MAX_BLOCK_ROWS, (rows // 8) * 8)
    total_blocks = pl.cdiv(rows, block_rows)

    num_cores = min(_num_tensorcores(), total_blocks)
    steps_per_core = pl.cdiv(total_blocks, num_cores)
    two_d_grid = num_cores > 1
    overflow_possible = num_cores * steps_per_core > total_blocks

    valid_rows_last = rows - (total_blocks - 1) * block_rows
    has_partial_last = valid_rows_last < block_rows
    full_blocks = total_blocks - (1 if has_partial_last else 0)

    if two_d_grid:
        grid = (num_cores, steps_per_core)

        def in_index_map(c, i):
            # Clamp so the DMA never walks past the array; the clamped duplicate
            # block index is unchanged from the previous step, so no re-DMA, and
            # the kernel skips accumulation for blk >= total_blocks.
            return (jnp.minimum(c * steps_per_core + i, total_blocks - 1), 0)

        out_index_map = lambda c, i: (c, 0, 0)
        dims = ("parallel", "arbitrary")
    else:
        grid = (steps_per_core,)
        in_index_map = lambda i: (i, 0)
        out_index_map = lambda i: (0, 0, 0)
        dims = ("arbitrary",)

    in_spec = pl.BlockSpec((block_rows, _LANES), in_index_map)
    out_spec = pl.BlockSpec((1, 1, 1), out_index_map)

    out_shapes = [jax.ShapeDtypeStruct((num_cores, 1, 1), jnp.float32)]
    scratch = [pltpu.VMEM((8, _LANES), jnp.float32)]
    if has_target:
        out_shapes.append(jax.ShapeDtypeStruct((num_cores, 1, 1), jnp.float32))
        scratch.append(pltpu.VMEM((8, _LANES), jnp.float32))

    # Explicit VMEM budget: double-buffered input blocks + accumulators + headroom.
    # Keeps 4 MiB blocks legal under v5e's 16 MiB default scoped limit and leaves
    # headroom under v7x's 64 MiB physical VMEM.
    block_bytes = block_rows * _LANES * x2d.dtype.itemsize
    vmem_needed = len(inputs) * 2 * block_bytes + (1 << 20)
    vmem_limit = int(min(max(vmem_needed + (8 << 20), 16 << 20), 48 << 20))

    kernel = _make_kernel(
        block_rows=block_rows, steps_per_core=steps_per_core,
        total_blocks=total_blocks, full_blocks=full_blocks,
        valid_rows_last=valid_rows_last, has_partial_last=has_partial_last,
        overflow_possible=overflow_possible,
        has_target=has_target, two_d_grid=two_d_grid)

    outs = pl.pallas_call(
        kernel,
        out_shape=tuple(out_shapes),
        grid_spec=pltpu.PrefetchScalarGridSpec(
            num_scalar_prefetch=0,
            grid=grid,
            in_specs=[in_spec] * len(inputs),
            out_specs=[out_spec] * len(out_shapes),
            scratch_shapes=scratch,
        ),
        compiler_params=pltpu.CompilerParams(
            dimension_semantics=dims,
            vmem_limit_bytes=vmem_limit,
        ),
    )(*inputs)

    inv_n = jnp.float32(1.0 / n)
    loss = (jnp.sum(outs[0]) + tail_bin) * inv_n
    if has_target:
        loss = loss + (jnp.sum(outs[1]) + tail_mse) * inv_n
    return loss


def _reference(x, t=None):
    xf = x.astype(jnp.float32)
    ax = jnp.abs(xf)
    binary = jnp.mean(jnp.minimum(ax, jnp.abs(1.0 - ax)))
    if t is None:
        return binary
    return binary + jnp.mean((jax.nn.sigmoid(xf) - t.astype(jnp.float32)) ** 2)


if __name__ == "__main__":
    key = jax.random.PRNGKey(0)
    ks = jax.random.split(key, 8)

    def check(name, loss, ref):
        assert jnp.allclose(loss, ref, rtol=1e-4, atol=1e-6), (name, loss, ref)

    # 1) Small NCHW-like codeword, forced through the Pallas kernel (both paths).
    soft = jax.random.normal(ks[0], (2, 4, 16, 16), dtype=jnp.float32)
    target = (jax.random.uniform(ks[1], (2, 4, 16, 16)) > 0.5).astype(jnp.float32)
    loss = ldpc_consistency_loss(soft, target, min_pallas_elems=0)
    jax.block_until_ready(loss)
    check("small+target(kernel)", loss, _reference(soft, target))
    loss = ldpc_consistency_loss(soft, min_pallas_elems=0)   # target_codeword=None path
    check("small no-target(kernel)", jax.block_until_ready(loss), _reference(soft))
    # default threshold -> plain-jnp fast path
    check("small fast-path", ldpc_consistency_loss(soft, target), _reference(soft, target))

    # 2) Single full block through the kernel (default threshold).
    soft = jax.random.normal(ks[2], (2, 4, 256, 256), dtype=jnp.float32)
    target = (jax.random.uniform(ks[3], (2, 4, 256, 256)) > 0.5).astype(jnp.float32)
    check("1-block", jax.block_until_ready(ldpc_consistency_loss(soft, target)),
          _reference(soft, target))

    # 3) Multi-block grid with a partial last block (exercises the masked tail block
    #    and, on 2-TensorCore chips, the parallel core split).
    soft = jax.random.normal(ks[4], (2, 4, 400, 400), dtype=jnp.float32)
    target = (jax.random.uniform(ks[5], (2, 4, 400, 400)) > 0.5).astype(jnp.float32)
    check("multi-block", jax.block_until_ready(ldpc_consistency_loss(soft, target)),
          _reference(soft, target))
    check("multi-block no-target", jax.block_until_ready(ldpc_consistency_loss(soft)),
          _reference(soft))

    # 4) Lane-misaligned element count: aligned prefix via the kernel, <128-element
    #    ragged tail summed in plain jnp.
    soft = jax.random.normal(ks[6], (1, 523, 517), dtype=jnp.float32)
    target = (jax.random.uniform(ks[7], (1, 523, 517)) > 0.5).astype(jnp.float32)
    check("misaligned", jax.block_until_ready(ldpc_consistency_loss(soft, target)),
          _reference(soft, target))

    print("KERNEL_OK")
</pallas_src>

<mosaic_0001>
module attributes {stable_mosaic.version = 11 : i64} {
  func.func @kernel(%arg0: i32, %arg1: memref<16x128xf32, #tpu.memory_space<vmem>>, %arg2: memref<16x128xf32, #tpu.memory_space<vmem>>, %arg3: memref<1x1x1xf32, #tpu.memory_space<vmem>>, %arg4: memref<1x1x1xf32, #tpu.memory_space<vmem>>, %arg5: memref<8x128xf32, #tpu.memory_space<vmem>>, %arg6: memref<8x128xf32, #tpu.memory_space<vmem>>) attributes {dimension_semantics = [#tpu.dimension_semantics<arbitrary>], iteration_bounds = array<i64: 1>, scalar_prefetch = 0 : i64, scratch_operands = 2 : i64, tpu.core_type = #tpu.core_type<tc>, window_params = [{transform_indices = @transform_0, window_bounds = array<i64: 16, 128>}, {transform_indices = @transform_1, window_bounds = array<i64: 16, 128>}, {pipeline_mode = #tpu.pipeline_mode<synchronous>, transform_indices = @transform_2, window_bounds = array<i64: 1, 1, 1>}, {pipeline_mode = #tpu.pipeline_mode<synchronous>, transform_indices = @transform_3, window_bounds = array<i64: 1, 1, 1>}]} {
    %c0_i32 = arith.constant 0 : i32
    %0 = arith.cmpi eq, %arg0, %c0_i32 : i32
    %1 = arith.extui %0 : i1 to i32
    %c0_i32_0 = arith.constant 0 : i32
    %2 = arith.cmpi ne, %1, %c0_i32_0 : i32
    scf.if %2 {
      %cst_19 = arith.constant 0.000000e+00 : f32
      %32 = vector.broadcast %cst_19 : f32 to vector<8x128xf32>
      %c0_20 = arith.constant 0 : index
      %c0_21 = arith.constant 0 : index
      %33 = vector.load %arg5[%c0_20, %c0_21] : memref<8x128xf32, #tpu.memory_space<vmem>>, vector<8x128xf32>
      tpu.vector_store %arg5[%c0_20, %c0_21], %32 {strides = array<i32>} : memref<8x128xf32, #tpu.memory_space<vmem>>, vector<8x128xf32>,
      %cst_22 = arith.constant 0.000000e+00 : f32
      %34 = vector.broadcast %cst_22 : f32 to vector<8x128xf32>
      %c0_23 = arith.constant 0 : index
      %c0_24 = arith.constant 0 : index
      %35 = vector.load %arg6[%c0_23, %c0_24] : memref<8x128xf32, #tpu.memory_space<vmem>>, vector<8x128xf32>
      tpu.vector_store %arg6[%c0_23, %c0_24], %34 {strides = array<i32>} : memref<8x128xf32, #tpu.memory_space<vmem>>, vector<8x128xf32>,
    } else {
    }
    %c0 = arith.constant 0 : index
    %c0_1 = arith.constant 0 : index
    %3 = vector.load %arg1[%c0, %c0_1] : memref<16x128xf32, #tpu.memory_space<vmem>>, vector<16x128xf32>
    %4 = math.absf %3 : vector<16x128xf32>
    %cst = arith.constant 1.000000e+00 : f32
    %5 = vector.broadcast %cst : f32 to vector<16x128xf32>
    %6 = arith.subf %5, %4 : vector<16x128xf32>
    %7 = math.absf %6 : vector<16x128xf32>
    %8 = arith.minimumf %4, %7 : vector<16x128xf32>
    %c0_2 = arith.constant 0 : index
    %c0_3 = arith.constant 0 : index
    %9 = vector.load %arg2[%c0_2, %c0_3] : memref<16x128xf32, #tpu.memory_space<vmem>>, vector<16x128xf32>
    %cst_4 = arith.constant 5.000000e-01 : f32
    %10 = vector.broadcast %cst_4 : f32 to vector<16x128xf32>
    %11 = arith.mulf %10, %3 : vector<16x128xf32>
    %12 = math.tanh %11 : vector<16x128xf32>
    %cst_5 = arith.constant 5.000000e-01 : f32
    %13 = vector.broadcast %cst_5 : f32 to vector<16x128xf32>
    %14 = arith.mulf %13, %12 : vector<16x128xf32>
    %cst_6 = arith.constant 5.000000e-01 : f32
    %15 = vector.broadcast %cst_6 : f32 to vector<16x128xf32>
    %16 = arith.addf %14, %15 : vector<16x128xf32>
    %17 = arith.subf %16, %9 : vector<16x128xf32>
    %18 = arith.mulf %17, %17 : vector<16x128xf32>
    %c0_7 = arith.constant 0 : index
    %c0_8 = arith.constant 0 : index
    %19 = vector.load %arg5[%c0_7, %c0_8] : memref<8x128xf32, #tpu.memory_space<vmem>>, vector<8x128xf32>
    %20 = vector.shape_cast %8 : vector<16x128xf32> to vector<2x8x128xf32>
    %cst_9 = arith.constant dense<0.000000e+00> : vector<8x128xf32>
    %21 = vector.multi_reduction <add>, %20, %cst_9 [0] : vector<2x8x128xf32> to vector<8x128xf32>
    %22 = arith.addf %19, %21 : vector<8x128xf32>
    %c0_10 = arith.constant 0 : index
    %c0_11 = arith.constant 0 : index
    %23 = vector.load %arg5[%c0_10, %c0_11] : memref<8x128xf32, #tpu.memory_space<vmem>>, vector<8x128xf32>
    tpu.vector_store %arg5[%c0_10, %c0_11], %22 {strides = array<i32>} : memref<8x128xf32, #tpu.memory_space<vmem>>, vector<8x128xf32>,
    %c0_12 = arith.constant 0 : index
    %c0_13 = arith.constant 0 : index
    %24 = vector.load %arg6[%c0_12, %c0_13] : memref<8x128xf32, #tpu.memory_space<vmem>>, vector<8x128xf32>
    %25 = vector.shape_cast %18 : vector<16x128xf32> to vector<2x8x128xf32>
    %cst_14 = arith.constant dense<0.000000e+00> : vector<8x128xf32>
    %26 = vector.multi_reduction <add>, %25, %cst_14 [0] : vector<2x8x128xf32> to vector<8x128xf32>
    %27 = arith.addf %24, %26 : vector<8x128xf32>
    %c0_15 = arith.constant 0 : index
    %c0_16 = arith.constant 0 : index
    %28 = vector.load %arg6[%c0_15, %c0_16] : memref<8x128xf32, #tpu.memory_space<vmem>>, vector<8x128xf32>
    tpu.vector_store %arg6[%c0_15, %c0_16], %27 {strides = array<i32>} : memref<8x128xf32, #tpu.memory_space<vmem>>, vector<8x128xf32>,
    %c0_i32_17 = arith.constant 0 : i32
    %29 = arith.cmpi eq, %arg0, %c0_i32_17 : i32
    %30 = arith.extui %29 : i1 to i32
    %c0_i32_18 = arith.constant 0 : i32
    %31 = arith.cmpi ne, %30, %c0_i32_18 : i32
    scf.if %31 {
      %c0_19 = arith.constant 0 : index
      %c0_20 = arith.constant 0 : index
      %32 = vector.load %arg5[%c0_19, %c0_20] : memref<8x128xf32, #tpu.memory_space<vmem>>, vector<8x128xf32>
      %33 = vector.shape_cast %32 : vector<8x128xf32> to vector<1x8x128xf32>
      %cst_21 = arith.constant dense<0.000000e+00> : vector<1xf32>
      %34 = vector.multi_reduction <add>, %33, %cst_21 [1, 2] : vector<1x8x128xf32> to vector<1xf32>
      %35 = vector.shape_cast %34 : vector<1xf32> to vector<1x1x1xf32>
      %36 = vector.extract %35[0, 0, 0] : f32 from vector<1x1x1xf32>
      %37 = vector.broadcast %36 : f32 to vector<1x1x1xf32>
      %c0_22 = arith.constant 0 : index
      %c0_23 = arith.constant 0 : index
      %c0_24 = arith.constant 0 : index
      %38 = vector.load %arg3[%c0_22, %c0_23, %c0_24] : memref<1x1x1xf32, #tpu.memory_space<vmem>>, vector<1x1x1xf32>
      tpu.vector_store %arg3[%c0_22, %c0_23, %c0_24], %37 {strides = array<i32>} : memref<1x1x1xf32, #tpu.memory_space<vmem>>, vector<1x1x1xf32>,
      %c0_25 = arith.constant 0 : index
      %c0_26 = arith.constant 0 : index
      %39 = vector.load %arg6[%c0_25, %c0_26] : memref<8x128xf32, #tpu.memory_space<vmem>>, vector<8x128xf32>
      %40 = vector.shape_cast %39 : vector<8x128xf32> to vector<1x8x128xf32>
      %cst_27 = arith.constant dense<0.000000e+00> : vector<1xf32>
      %41 = vector.multi_reduction <add>, %40, %cst_27 [1, 2] : vector<1x8x128xf32> to vector<1xf32>
      %42 = vector.shape_cast %41 : vector<1xf32> to vector<1x1x1xf32>
      %43 = vector.extract %42[0, 0, 0] : f32 from vector<1x1x1xf32>
      %44 = vector.broadcast %43 : f32 to vector<1x1x1xf32>
      %c0_28 = arith.constant 0 : index
      %c0_29 = arith.constant 0 : index
      %c0_30 = arith.constant 0 : index
      %45 = vector.load %arg4[%c0_28, %c0_29, %c0_30] : memref<1x1x1xf32, #tpu.memory_space<vmem>>, vector<1x1x1xf32>
      tpu.vector_store %arg4[%c0_28, %c0_29, %c0_30], %44 {strides = array<i32>} : memref<1x1x1xf32, #tpu.memory_space<vmem>>, vector<1x1x1xf32>,
    } else {
    }
    return
  }
  func.func @transform_0(%arg0: i32) -> (i32, i32) {
    %c0_i32 = arith.constant 0 : i32
    %c0_i32_0 = arith.constant 0 : i32
    return %arg0, %c0_i32 : i32, i32
  }
  func.func @transform_1(%arg0: i32) -> (i32, i32) {
    %c0_i32 = arith.constant 0 : i32
    %c0_i32_0 = arith.constant 0 : i32
    return %arg0, %c0_i32 : i32, i32
  }
  func.func @transform_2(%arg0: i32) -> (i32, i32, i32) {
    %c0_i32 = arith.constant 0 : i32
    %c0_i32_0 = arith.constant 0 : i32
    %c0_i32_1 = arith.constant 0 : i32
    %c0_i32_2 = arith.constant 0 : i32
    return %c0_i32, %c0_i32_0, %c0_i32_1 : i32, i32, i32
  }
  func.func @transform_3(%arg0: i32) -> (i32, i32, i32) {
    %c0_i32 = arith.constant 0 : i32
    %c0_i32_0 = arith.constant 0 : i32
    %c0_i32_1 = arith.constant 0 : i32
    %c0_i32_2 = arith.constant 0 : i32
    return %c0_i32, %c0_i32_0, %c0_i32_1 : i32, i32, i32
  }
}

</mosaic_0001>

<llo_original>
// kernel: tpu_custom_call.1
$region0: #{tpu_custom_call.1}
  #allocation0 [shape = 'u32[]', space=smem, size = 0x4, offset = 0x4, fixed_abs, tag = 'smem constant byte address 0x4 - core index']
  #allocation1 [shape = 'u32[72,128]{1,0:T(1,128)}', space=vmem, size = 0x9000, scoped, tag = 'internal scratch']
  #allocation2 [shape = 'f32[8,128]{1,0:T(8,128)}', space=vmem, size = 0x1000, scoped, tag = 'scratch operand']
  #allocation3 [shape = 'f32[8,128]{1,0:T(8,128)}', space=vmem, size = 0x1000, scoped, tag = 'scratch operand']
  %s0 = inlined_call_operand.hbm [shape: f32[16,128], index: 0, kind: input, shape index: {}]
  %s1 = inlined_call_operand.hbm [shape: f32[16,128], index: 1, kind: input, shape index: {}]
  %s2 = inlined_call_operand.hbm [shape: f32[1,1,1], index: 2, kind: output, shape index: {0}]
  %s3 = inlined_call_operand.hbm [shape: f32[1,1,1], index: 3, kind: output, shape index: {1}]
  %4 = xla_tuple %s2, %s3
  %s5 = sld [smem:[#allocation0]]
  $region42: #{tpu_custom_call.1} parent=0
    _
  %s7 = ssub.s32 1, %s5
  %s8 = scalar_select 0, %s7, %s5
  $region1: #{tpu_custom_call.1} parent=0
    #allocation4 [shape = 'u8[8192]{0}', space=vmem, size = 0x2000, scoped, tag = 'input window, operand 0, single buffered']
    #allocation5 [shape = 's32[1]{0}', space=sflag, size = 0x4, scoped, tag = 'scoped memory for tpu_custom_call.1']
    #allocation6 [shape = 's32[1]{0}', space=sflag, size = 0x4, scoped, tag = 'scoped memory for tpu_custom_call.1']
    #allocation7 [shape = 'u8[8192]{0}', space=vmem, size = 0x2000, scoped, tag = 'input window, operand 1, single buffered']
    #allocation8 [shape = 's32[1]{0}', space=sflag, size = 0x4, scoped, tag = 'scoped memory for tpu_custom_call.1']
    #allocation9 [shape = 'u8[512]{0}', space=vmem, size = 0x400, scoped, tag = 'output window, operand 0, single buffered']
    #allocation10 [shape = 'u8[512]{0}', space=vmem, size = 0x400, scoped, tag = 'output window, operand 1, single buffered']
    #allocation11 [shape = 's32[1]{0}', space=sflag, size = 0x4, scoped, tag = 'scoped memory for tpu_custom_call.1']
    %9 = vsyncpa [#allocation5], 0
    %10 = vsyncpa [#allocation8], 0
    %11 = vsyncpa [#allocation6], 0
    %12 = vsyncpa [#allocation11], 0
    // Predicated region
    $region2: #{tpu_custom_call.1} parent=1 // pred_check
      _
    $region3: #{tpu_custom_call.1} parent=1 // pred_check_branch
      %14 = sbr.rel (0) target = $region5
    $region4: #{tpu_custom_call.1} parent=1 // pred_region
      %16 = vsyncadd [#allocation5], 0
      %s17 = sshll.u32 %s0, 4
      %s18 = int_to_ptr.hbm [resolvable:$true] %s17
      %s19 = sshll.u32 [#allocation4], 4
      %s20 = int_to_ptr.vmem [resolvable:$true] %s19
      %25 = dma.hbm_to_vmem [thread:$0]  %s18, 256, %s20, [#allocation5], 128, 128, 8
    $region5: #{tpu_custom_call.1} parent=1 // pred_fallthru
      _
    // Predicated region
    $region6: #{tpu_custom_call.1} parent=1 // pred_check
      _
    $region7: #{tpu_custom_call.1} parent=1 // pred_check_branch
      %27 = sbr.rel (0) target = $region9
    $region8: #{tpu_custom_call.1} parent=1 // pred_region
      %29 = vsyncadd [#allocation8], 0
      %s30 = sshll.u32 %s1, 4
      %s31 = int_to_ptr.hbm [resolvable:$true] %s30
      %s32 = sshll.u32 [#allocation7], 4
      %s33 = int_to_ptr.vmem [resolvable:$true] %s32
      %38 = dma.hbm_to_vmem [thread:$0]  %s31, 256, %s33, [#allocation8], 128, 128, 8
    $region9: #{tpu_custom_call.1} parent=1 // pred_fallthru
      _
    // Predicated region
    $region10: #{tpu_custom_call.1} parent=1 // pred_check
      _
    $region11: #{tpu_custom_call.1} parent=1 // pred_check_branch
      %40 = sbr.rel (0) target = $region13
    $region12: #{tpu_custom_call.1} parent=1 // pred_region
      %42 = dma.done [#allocation5], 256
    $region13: #{tpu_custom_call.1} parent=1 // pred_fallthru
      _
    // Predicated region
    $region14: #{tpu_custom_call.1} parent=1 // pred_check
      _
    $region15: #{tpu_custom_call.1} parent=1 // pred_check_branch
      %44 = sbr.rel (0) target = $region17
    $region16: #{tpu_custom_call.1} parent=1 // pred_region
      %46 = dma.done [#allocation8], 256
    $region17: #{tpu_custom_call.1} parent=1 // pred_fallthru
      _
    %p47 = scmp.eq.s32.totalorder 0, 0
    // Predicated region
    $region18: #{tpu_custom_call.1} parent=1 // pred_check
      %p48 = pneg %p47
    $region19: #{tpu_custom_call.1} parent=1 // pred_check_branch
      %50 = sbr.rel (%p48) target = $region21
    $region20: #{tpu_custom_call.1} parent=1 // pred_region
      %51 = vst [vmem:[#allocation2] sm:$0xff] 0.0
      %52 = vst [vmem:[#allocation3] sm:$0xff] 0.0
    $region21: #{tpu_custom_call.1} parent=1 // pred_fallthru
      _
    %v53 = vld [vmem:[#allocation4] sm:$0xff]
    %v54 = vld [vmem:[#allocation4 + $0x8] sm:$0xff]
    %v55 = vand.u32 2147483647, %v53
    %v56 = vand.u32 2147483647, %v54
    %v57 = vsub.f32 1.0, %v55
    %v58 = vsub.f32 1.0, %v56
    %v59 = vand.u32 2147483647, %v57
    %v60 = vand.u32 2147483647, %v58
    %v61 = vmin.f32 %v55, %v59
    %v62 = vmin.f32 %v56, %v60
    %v63 = vld [vmem:[#allocation7] sm:$0xff]
    %v64 = vld [vmem:[#allocation7 + $0x8] sm:$0xff]
    %v65 = vmul.f32 %v53, 0.5
    %v66 = vmul.f32 %v54, 0.5
    %v67 = vtanh.pop %v65
    %v68 = vtanh.pop %v66
    %v69 = vmul.f32 %v67, 0.5
    %v70 = vmul.f32 %v68, 0.5
    %v71 = vadd.f32 %v69, 0.5
    %v72 = vadd.f32 %v70, 0.5
    %v73 = vsub.f32 %v71, %v63
    %v74 = vsub.f32 %v72, %v64
    %v75 = vmul.f32 %v73, %v73
    %v76 = vmul.f32 %v74, %v74
    %v77 = vld [vmem:[#allocation2] sm:$0xff]
    %v78 = vadd.f32 %v61, %v62
    %v79 = vadd.f32 %v77, %v78
    %80 = vst [vmem:[#allocation2] sm:$0xff] %v79
    %v81 = vld [vmem:[#allocation3] sm:$0xff]
    %v82 = vadd.f32 %v75, %v76
    %v83 = vadd.f32 %v81, %v82
    %84 = vst [vmem:[#allocation3] sm:$0xff] %v83
    // Predicated region
    $region22: #{tpu_custom_call.1} parent=1 // pred_check
      %p85 = pneg %p47
    $region23: #{tpu_custom_call.1} parent=1 // pred_check_branch
      %87 = sbr.rel (%p85) target = $region25
    $region24: #{tpu_custom_call.1} parent=1 // pred_region
      %v88 = vld [vmem:[#allocation2] sm:$0xff]
      %89 = vadd.xlane.f32.xlu0 %v88
      %v90 = vpop.xlane.xlu0 %89
      %v91 = vrot.slane %v90, 4
      %v92 = vadd.f32 %v90, %v91
      %v93 = vrot.slane %v92, 2
      %v94 = vadd.f32 %v92, %v93
      %v95 = vrot.slane %v94, 1
      %v96 = vadd.f32 %v94, %v95
      %s97 = vtos %v96
      %v98 = vstv %s97
      %vm99 = vcmask 0
      %100 = vst.msk [vmem:[#allocation9] sm:$0x1] %vm99, %v98
      %v101 = vld [vmem:[#allocation3] sm:$0xff]
      %102 = vadd.xlane.f32.xlu0 %v101
      %v103 = vpop.xlane.xlu0 %102
      %v104 = vrot.slane %v103, 4
      %v105 = vadd.f32 %v103, %v104
      %v106 = vrot.slane %v105, 2
      %v107 = vadd.f32 %v105, %v106
      %v108 = vrot.slane %v107, 1
      %v109 = vadd.f32 %v107, %v108
      %s110 = vtos %v109
      %v111 = vstv %s110
      %112 = vst.msk [vmem:[#allocation10] sm:$0x1] %vm99, %v111
    $region25: #{tpu_custom_call.1} parent=1 // pred_fallthru
      _
    // Predicated region
    $region26: #{tpu_custom_call.1} parent=1 // pred_check
      _
    $region27: #{tpu_custom_call.1} parent=1 // pred_check_branch
      %114 = sbr.rel (0) target = $region29
    $region28: #{tpu_custom_call.1} parent=1 // pred_region
      %116 = vsyncadd [#allocation6], 0
      %s118 = sshll.u32 [#allocation9], 4
      %s119 = int_to_ptr.vmem [resolvable:$true] %s118
      %s120 = sshll.u32 %s2, 4
      %s121 = int_to_ptr.hbm [resolvable:$true] %s120
      %123 = dma.vmem_to_hbm [thread:$0]  %s119, 16, %s121, [#allocation6]
    $region29: #{tpu_custom_call.1} parent=1 // pred_fallthru
      _
    // Predicated region
    $region30: #{tpu_custom_call.1} parent=1 // pred_check
      _
    $region31: #{tpu_custom_call.1} parent=1 // pred_check_branch
      %125 = sbr.rel (0) target = $region33
    $region32: #{tpu_custom_call.1} parent=1 // pred_region
      %127 = vsyncadd [#allocation11], 0
      %s129 = sshll.u32 [#allocation10], 4
      %s130 = int_to_ptr.vmem [resolvable:$true] %s129
      %s131 = sshll.u32 %s3, 4
      %s132 = int_to_ptr.hbm [resolvable:$true] %s131
      %134 = dma.vmem_to_hbm [thread:$0]  %s130, 16, %s132, [#allocation11]
    $region33: #{tpu_custom_call.1} parent=1 // pred_fallthru
      _
    // Predicated region
    $region34: #{tpu_custom_call.1} parent=1 // pred_check
      _
    $region35: #{tpu_custom_call.1} parent=1 // pred_check_branch
      %136 = sbr.rel (0) target = $region37
    $region36: #{tpu_custom_call.1} parent=1 // pred_region
      %138 = dma.done [#allocation6], 16
    $region37: #{tpu_custom_call.1} parent=1 // pred_fallthru
      _
    // Predicated region
    $region38: #{tpu_custom_call.1} parent=1 // pred_check
      _
    $region39: #{tpu_custom_call.1} parent=1 // pred_check_branch
      %140 = sbr.rel (0) target = $region41
    $region40: #{tpu_custom_call.1} parent=1 // pred_region
      %142 = dma.done [#allocation11], 16
    $region41: #{tpu_custom_call.1} parent=1 // pred_fallthru
      _
    %143 = vsyncpa [#allocation5], 1
    %144 = vsyncpa [#allocation8], 1
    %145 = vsyncpa [#allocation6], 1
    %146 = vsyncpa [#allocation11], 1

</llo_original>
